<compile_context>
chip_gen: v5e
topology: v5e:2x2
jax: 0.10.0
libtpu: 0.0.40
codegen_flags: <defaults>
</compile_context>

<pallas_src>
import jax
import jax.numpy as jnp
from jax import lax
from jax.experimental import pallas as pl
from jax.experimental.pallas import tpu as pltpu

# ---- hyperparameters (from the PyTorch script) -------------------------------
NUM_USERS = 3
NUM_ITEMS = 3
EMBEDDING_DIM = 8
HIDDEN_DIM = 16
DROPOUT_RATE = 0.3  # nn.Dropout is the identity at inference time

# ---- TPU tiling constants -----------------------------------------------------
LANE = 128
SUBLANE = 8

F_IN = 2 * EMBEDDING_DIM + 2     # 18 real input features
ITEM_BASE = 64                   # item rows start at row 64 of the fused table M
MAX_TB = 1024                    # batch tile (rows per grid step), multiple of 128

assert NUM_USERS <= ITEM_BASE and NUM_ITEMS <= LANE - ITEM_BASE


def _round_up(x, m):
    return (x + m - 1) // m * m


# ---- fused Pallas kernel ------------------------------------------------------
def fused_rec_kernel(pk_ref, m_ref, w1u_ref, w1i_ref, b1_ref, w2_ref, b2_ref,
                     o_ref):
    tb = pk_ref.shape[0]

    pk = pk_ref[...]                              # [TB, 4] f32
    uid = pk[:, 0:1].astype(jnp.int32)            # [TB, 1]
    iid = pk[:, 1:2].astype(jnp.int32)            # [TB, 1]
    uf = pk[:, 2:3]                               # [TB, 1]
    itf = pk[:, 3:4]                              # [TB, 1]

    # Combined one-hot: user hit in columns [0, NUM_USERS),
    # item hit in columns [ITEM_BASE, ITEM_BASE + NUM_ITEMS).
    col = lax.broadcasted_iota(jnp.int32, (tb, LANE), 1)
    onehot = ((col == uid) | (col == iid + ITEM_BASE)).astype(jnp.float32)

    # Embedding gather + concat + fc1 in one MXU pass (M = T_comb @ W1, offline),
    # then the two scalar-feature rows of W1, bias and ReLU on the VPU.
    h = jnp.dot(onehot, m_ref[...], preferred_element_type=jnp.float32)   # [TB, 128]
    h = h + uf * w1u_ref[...] + itf * w1i_ref[...] + b1_ref[...]
    h = jnp.maximum(h, 0.0)
    # (dropout = identity in eval mode)

    # fc2 as a transposed matmul: y[1, TB] = w2 . h^T  -> output is lane-dense.
    y = lax.dot_general(w2_ref[...], h, (((1,), (1,)), ((), ())),
                        preferred_element_type=jnp.float32)               # [1, TB]
    o_ref[...] = jax.nn.sigmoid(y + b2_ref[0, 0])


# ---- wrapper ------------------------------------------------------------------
def recommendation_forward(prepared, user_id, item_id, user_feature, item_feature):
    B = user_id.shape[0]
    TB = min(MAX_TB, _round_up(max(B, 1), LANE))      # multiple of 128
    B_pad = _round_up(B, TB)
    pad = B_pad - B

    # Single packed per-row input stream: [uid, iid, uf, if] as f32.
    packed = jnp.stack(
        [user_id.astype(jnp.float32),
         item_id.astype(jnp.float32),
         user_feature.astype(jnp.float32),
         item_feature.astype(jnp.float32)], axis=1)                       # [B, 4]
    packed = jnp.pad(packed, ((0, pad), (0, 0)))                          # [B_pad, 4]

    full = lambda shape: pl.BlockSpec(shape, lambda i: (0, 0))

    out = pl.pallas_call(
        fused_rec_kernel,
        out_shape=jax.ShapeDtypeStruct((1, B_pad), jnp.float32),
        grid=(B_pad // TB,),
        in_specs=[
            pl.BlockSpec((TB, 4), lambda i: (i, 0)),          # packed rows
            full((LANE, LANE)),                               # M = T_comb @ W1
            full((1, LANE)),                                  # W1 row 16 (user feat)
            full((1, LANE)),                                  # W1 row 17 (item feat)
            full((1, LANE)),                                  # b1
            full((1, LANE)),                                  # w2 row
            pl.BlockSpec(memory_space=pltpu.MemorySpace.SMEM),  # b2 scalar
        ],
        out_specs=pl.BlockSpec((1, TB), lambda i: (0, i)),    # lane-dense output
        compiler_params=pltpu.CompilerParams(
            dimension_semantics=("parallel",),
        ),
    )(packed, prepared["m"], prepared["w1u"], prepared["w1i"],
      prepared["b1"], prepared["w2"], prepared["b2"])

    return out[0, :B]                                          # [B]


# ---- parameters ---------------------------------------------------------------
def init_params(key):
    k = jax.random.split(key, 6)
    fin = F_IN
    return {
        "user_embedding": jax.random.normal(k[0], (NUM_USERS, EMBEDDING_DIM), jnp.float32),
        "item_embedding": jax.random.normal(k[1], (NUM_ITEMS, EMBEDDING_DIM), jnp.float32),
        # stored as [in, out] so the kernel computes x @ W (PyTorch Linear is x @ W.T)
        "w1": jax.random.normal(k[2], (fin, HIDDEN_DIM), jnp.float32) * 0.1,
        "b1": jax.random.normal(k[3], (1, HIDDEN_DIM), jnp.float32) * 0.1,
        "w2": jax.random.normal(k[4], (HIDDEN_DIM, 1), jnp.float32) * 0.1,
        "b2": jax.random.normal(k[5], (1, 1), jnp.float32) * 0.1,
    }


def prepare_params(params):
    """One-time offline fusion/padding of the parameters into TPU-tile layouts."""
    E, H = EMBEDDING_DIM, HIDDEN_DIM
    w1 = params["w1"]                                          # [18, 16]

    # Fused gather+fc1 matrix: M = T_comb @ W1_pad, built directly.
    m = jnp.zeros((LANE, LANE), jnp.float32)
    m = m.at[:NUM_USERS, :H].set(params["user_embedding"] @ w1[:E, :])
    m = m.at[ITEM_BASE:ITEM_BASE + NUM_ITEMS, :H].set(
        params["item_embedding"] @ w1[E:2 * E, :])

    w1u = jnp.zeros((1, LANE), jnp.float32).at[0, :H].set(w1[2 * E, :])
    w1i = jnp.zeros((1, LANE), jnp.float32).at[0, :H].set(w1[2 * E + 1, :])
    b1 = jnp.zeros((1, LANE), jnp.float32).at[:, :H].set(params["b1"])
    w2 = jnp.zeros((1, LANE), jnp.float32).at[0, :H].set(params["w2"][:, 0])
    b2 = params["b2"].reshape(1, 1).astype(jnp.float32)
    return {"m": m, "w1u": w1u, "w1i": w1i, "b1": b1, "w2": w2, "b2": b2}


# ---- demo / correctness check -------------------------------------------------
if __name__ == "__main__":
    root = jax.random.PRNGKey(0)
    kp, kf = jax.random.split(root)
    params = init_params(kp)
    prepared = prepare_params(params)

    # batch of 6 interactions, matching interaction_data in the PyTorch script
    user_id = jnp.array([0, 0, 1, 1, 2, 2], dtype=jnp.int32)
    item_id = jnp.array([0, 1, 0, 2, 1, 2], dtype=jnp.int32)
    kf1, kf2 = jax.random.split(kf)
    user_feature = jax.random.uniform(kf1, (6,), jnp.float32)
    item_feature = jax.random.uniform(kf2, (6,), jnp.float32)

    fwd = jax.jit(recommendation_forward)
    out = jax.block_until_ready(fwd(prepared, user_id, item_id, user_feature, item_feature))

    # pure-JAX reference of the same math (unpadded, unfused parameters)
    x = jnp.concatenate(
        [params["user_embedding"][user_id],
         params["item_embedding"][item_id],
         user_feature[:, None], item_feature[:, None]], axis=1)
    ref = jax.nn.sigmoid(
        jnp.maximum(x @ params["w1"] + params["b1"], 0.0) @ params["w2"] + params["b2"]
    ).squeeze(-1)

    assert out.shape == (6,), out.shape
    assert jnp.allclose(out, ref, atol=1e-5), (out, ref)

    print("KERNEL_OK")
</pallas_src>

<mosaic_0001>
module attributes {stable_mosaic.version = 11 : i64} {
  func.func @fused_rec_kernel(%arg0: i32, %arg1: memref<128x4xf32, #tpu.memory_space<vmem>>, %arg2: memref<128x128xf32, #tpu.memory_space<vmem>>, %arg3: memref<1x128xf32, #tpu.memory_space<vmem>>, %arg4: memref<1x128xf32, #tpu.memory_space<vmem>>, %arg5: memref<1x128xf32, #tpu.memory_space<vmem>>, %arg6: memref<1x128xf32, #tpu.memory_space<vmem>>, %arg7: memref<1x1xf32, #tpu.memory_space<smem>>, %arg8: memref<1x128xf32, #tpu.memory_space<vmem>>) attributes {dimension_semantics = [#tpu.dimension_semantics<parallel>], iteration_bounds = array<i64: 1>, scalar_prefetch = 0 : i64, scratch_operands = 0 : i64, tpu.core_type = #tpu.core_type<tc>, window_params = [{transform_indices = @transform_0, window_bounds = array<i64: 128, 4>}, {pipeline_mode = #tpu.pipeline_mode<synchronous>, transform_indices = @transform_1, window_bounds = array<i64: 128, 128>}, {pipeline_mode = #tpu.pipeline_mode<synchronous>, transform_indices = @transform_2, window_bounds = array<i64: 1, 128>}, {pipeline_mode = #tpu.pipeline_mode<synchronous>, transform_indices = @transform_3, window_bounds = array<i64: 1, 128>}, {pipeline_mode = #tpu.pipeline_mode<synchronous>, transform_indices = @transform_4, window_bounds = array<i64: 1, 128>}, {pipeline_mode = #tpu.pipeline_mode<synchronous>, transform_indices = @transform_5, window_bounds = array<i64: 1, 128>}, {transform_indices = @transform_6, window_bounds = array<i64: 1, 1>}, {transform_indices = @transform_7, window_bounds = array<i64: 1, 128>}]} {
    %c0 = arith.constant 0 : index
    %c0_0 = arith.constant 0 : index
    %0 = vector.load %arg1[%c0, %c0_0] : memref<128x4xf32, #tpu.memory_space<vmem>>, vector<128x4xf32>
    %1 = vector.extract_strided_slice %0 {offsets = [0, 0], sizes = [128, 1], strides = [1, 1]} : vector<128x4xf32> to vector<128x1xf32>
    %2 = arith.fptosi %1 : vector<128x1xf32> to vector<128x1xi32>
    %3 = vector.extract_strided_slice %0 {offsets = [0, 1], sizes = [128, 1], strides = [1, 1]} : vector<128x4xf32> to vector<128x1xf32>
    %4 = arith.fptosi %3 : vector<128x1xf32> to vector<128x1xi32>
    %5 = vector.extract_strided_slice %0 {offsets = [0, 2], sizes = [128, 1], strides = [1, 1]} : vector<128x4xf32> to vector<128x1xf32>
    %6 = vector.extract_strided_slice %0 {offsets = [0, 3], sizes = [128, 1], strides = [1, 1]} : vector<128x4xf32> to vector<128x1xf32>
    %7 = tpu.iota {dimensions = array<i32: 1>} : vector<128x128xi32>
    %8 = vector.broadcast %2 : vector<128x1xi32> to vector<128x128xi32>
    %9 = arith.cmpi eq, %7, %8 : vector<128x128xi32>
    %c64_i32 = arith.constant 64 : i32
    %10 = vector.broadcast %c64_i32 : i32 to vector<128x1xi32>
    %11 = arith.addi %4, %10 : vector<128x1xi32>
    %12 = vector.broadcast %11 : vector<128x1xi32> to vector<128x128xi32>
    %13 = arith.cmpi eq, %7, %12 : vector<128x128xi32>
    %14 = arith.ori %9, %13 : vector<128x128xi1>
    %15 = arith.extui %14 : vector<128x128xi1> to vector<128x128xi32>
    %16 = arith.sitofp %15 : vector<128x128xi32> to vector<128x128xf32>
    %c0_1 = arith.constant 0 : index
    %c0_2 = arith.constant 0 : index
    %17 = vector.load %arg2[%c0_1, %c0_2] : memref<128x128xf32, #tpu.memory_space<vmem>>, vector<128x128xf32>
    %cst = arith.constant dense<0.000000e+00> : vector<128x128xf32>
    %18 = tpu.matmul %16, %17, %cst {dimension_numbers = #tpu.dot_dimension_numbers<[1], [0], [0], [1], [0, 0, 1, 1], [], []>} : vector<128x128xf32>, vector<128x128xf32>, vector<128x128xf32> -> vector<128x128xf32>
    %c0_3 = arith.constant 0 : index
    %c0_4 = arith.constant 0 : index
    %19 = vector.load %arg3[%c0_3, %c0_4] : memref<1x128xf32, #tpu.memory_space<vmem>>, vector<1x128xf32>
    %20 = vector.broadcast %5 : vector<128x1xf32> to vector<128x128xf32>
    %21 = vector.broadcast %19 : vector<1x128xf32> to vector<128x128xf32>
    %22 = arith.mulf %20, %21 : vector<128x128xf32>
    %23 = arith.addf %18, %22 : vector<128x128xf32>
    %c0_5 = arith.constant 0 : index
    %c0_6 = arith.constant 0 : index
    %24 = vector.load %arg4[%c0_5, %c0_6] : memref<1x128xf32, #tpu.memory_space<vmem>>, vector<1x128xf32>
    %25 = vector.broadcast %6 : vector<128x1xf32> to vector<128x128xf32>
    %26 = vector.broadcast %24 : vector<1x128xf32> to vector<128x128xf32>
    %27 = arith.mulf %25, %26 : vector<128x128xf32>
    %28 = arith.addf %23, %27 : vector<128x128xf32>
    %c0_7 = arith.constant 0 : index
    %c0_8 = arith.constant 0 : index
    %29 = vector.load %arg5[%c0_7, %c0_8] : memref<1x128xf32, #tpu.memory_space<vmem>>, vector<1x128xf32>
    %30 = vector.broadcast %29 : vector<1x128xf32> to vector<128x128xf32>
    %31 = arith.addf %28, %30 : vector<128x128xf32>
    %cst_9 = arith.constant 0.000000e+00 : f32
    %32 = vector.broadcast %cst_9 : f32 to vector<128x128xf32>
    %33 = arith.maximumf %31, %32 : vector<128x128xf32>
    %c0_10 = arith.constant 0 : index
    %c0_11 = arith.constant 0 : index
    %34 = vector.load %arg6[%c0_10, %c0_11] : memref<1x128xf32, #tpu.memory_space<vmem>>, vector<1x128xf32>
    %cst_12 = arith.constant dense<0.000000e+00> : vector<1x128xf32>
    %35 = tpu.matmul %34, %33, %cst_12 {dimension_numbers = #tpu.dot_dimension_numbers<[1], [1], [0], [0], [0, 0, 1, 0], [], []>} : vector<1x128xf32>, vector<128x128xf32>, vector<1x128xf32> -> vector<1x128xf32>
    %c0_13 = arith.constant 0 : index
    %c0_14 = arith.constant 0 : index
    %36 = memref.load %arg7[%c0_13, %c0_14] : memref<1x1xf32, #tpu.memory_space<smem>>
    %37 = vector.broadcast %36 : f32 to vector<1x128xf32>
    %38 = arith.addf %35, %37 : vector<1x128xf32>
    %39 = arith.negf %38 : vector<1x128xf32>
    %40 = math.exp %39 : vector<1x128xf32>
    %cst_15 = arith.constant 1.000000e+00 : f32
    %41 = vector.broadcast %cst_15 : f32 to vector<1x128xf32>
    %42 = arith.addf %41, %40 : vector<1x128xf32>
    %43 = arith.divf %41, %42 : vector<1x128xf32>
    %c0_16 = arith.constant 0 : index
    %c0_17 = arith.constant 0 : index
    %44 = vector.load %arg8[%c0_16, %c0_17] : memref<1x128xf32, #tpu.memory_space<vmem>>, vector<1x128xf32>
    tpu.vector_store %arg8[%c0_16, %c0_17], %43 {strides = array<i32>} : memref<1x128xf32, #tpu.memory_space<vmem>>, vector<1x128xf32>,
    return
  }
  func.func @transform_0(%arg0: i32) -> (i32, i32) {
    %c0_i32 = arith.constant 0 : i32
    %c0_i32_0 = arith.constant 0 : i32
    return %arg0, %c0_i32 : i32, i32
  }
  func.func @transform_1(%arg0: i32) -> (i32, i32) {
    %c0_i32 = arith.constant 0 : i32
    %c0_i32_0 = arith.constant 0 : i32
    %c0_i32_1 = arith.constant 0 : i32
    return %c0_i32, %c0_i32_0 : i32, i32
  }
  func.func @transform_2(%arg0: i32) -> (i32, i32) {
    %c0_i32 = arith.constant 0 : i32
    %c0_i32_0 = arith.constant 0 : i32
    %c0_i32_1 = arith.constant 0 : i32
    return %c0_i32, %c0_i32_0 : i32, i32
  }
  func.func @transform_3(%arg0: i32) -> (i32, i32) {
    %c0_i32 = arith.constant 0 : i32
    %c0_i32_0 = arith.constant 0 : i32
    %c0_i32_1 = arith.constant 0 : i32
    return %c0_i32, %c0_i32_0 : i32, i32
  }
  func.func @transform_4(%arg0: i32) -> (i32, i32) {
    %c0_i32 = arith.constant 0 : i32
    %c0_i32_0 = arith.constant 0 : i32
    %c0_i32_1 = arith.constant 0 : i32
    return %c0_i32, %c0_i32_0 : i32, i32
  }
  func.func @transform_5(%arg0: i32) -> (i32, i32) {
    %c0_i32 = arith.constant 0 : i32
    %c0_i32_0 = arith.constant 0 : i32
    %c0_i32_1 = arith.constant 0 : i32
    return %c0_i32, %c0_i32_0 : i32, i32
  }
  func.func @transform_6(%arg0: i32) -> (i32, i32) {
    %c0_i32 = arith.constant 0 : i32
    %c0_i32_0 = arith.constant 0 : i32
    %c0_i32_1 = arith.constant 0 : i32
    return %c0_i32, %c0_i32_0 : i32, i32
  }
  func.func @transform_7(%arg0: i32) -> (i32, i32) {
    %c0_i32 = arith.constant 0 : i32
    %c0_i32_0 = arith.constant 0 : i32
    return %c0_i32, %arg0 : i32, i32
  }
}

</mosaic_0001>

<llo_original>
// kernel: recommendation_forward.1
$region0: #{recommendation_forward.1}
  #allocation0 [shape = 'u32[]', space=smem, size = 0x4, offset = 0x4, fixed_abs, tag = 'smem constant byte address 0x4 - core index']
  #allocation1 [shape = 'u32[72,128]{1,0:T(1,128)}', space=vmem, size = 0x9000, scoped, tag = 'internal scratch']
  #allocation2 [shape = 'f32[1,1]{1,0:T(1,128)S(6)}', space=smem, size = 0x200, scoped, tag = 'scoped memory for recommendation_forward.1']
  %s0 = inlined_call_operand.vmem [shape: f32[128,4], index: 0, kind: input, shape index: {}]
  %s1 = inlined_call_operand.vmem [shape: f32[128,128], index: 1, kind: input, shape index: {}]
  %s2 = inlined_call_operand.vmem [shape: f32[1,128], index: 2, kind: input, shape index: {}]
  %s3 = inlined_call_operand.vmem [shape: f32[1,128], index: 3, kind: input, shape index: {}]
  %s4 = inlined_call_operand.vmem [shape: f32[1,128], index: 4, kind: input, shape index: {}]
  %s5 = inlined_call_operand.vmem [shape: f32[1,128], index: 5, kind: input, shape index: {}]
  %s6 = inlined_call_operand.<no memory space> [shape: f32[1,1], index: 6, kind: input, shape index: {}]
  %s7 = inlined_call_operand.vmem [shape: f32[1,128], index: 7, kind: output, shape index: {}]
  %s8 = sld [smem:[#allocation0]]
  $region38: #{recommendation_forward.1} parent=0
    _
  %s10 = ssub.s32 1, %s8
  %s11 = scalar_select 0, %s10, %s8
  %12 = sst [smem:[#allocation2]] %s6
  // Predicated region
  $region2: #{recommendation_forward.1} parent=0 // pred_check
    _
  $region3: #{recommendation_forward.1} parent=0 // pred_check_branch
    %14 = sbr.rel (0) target = $region5
  $region4: #{recommendation_forward.1} parent=0 // pred_region
    _
  $region5: #{recommendation_forward.1} parent=0 // pred_fallthru
    _
  // Predicated region
  $region6: #{recommendation_forward.1} parent=0 // pred_check
    _
  $region7: #{recommendation_forward.1} parent=0 // pred_check_branch
    %16 = sbr.rel (0) target = $region9
  $region8: #{recommendation_forward.1} parent=0 // pred_region
    _
  $region9: #{recommendation_forward.1} parent=0 // pred_fallthru
    _
  // Predicated region
  $region10: #{recommendation_forward.1} parent=0 // pred_check
    _
  $region11: #{recommendation_forward.1} parent=0 // pred_check_branch
    %18 = sbr.rel (0) target = $region13
  $region12: #{recommendation_forward.1} parent=0 // pred_region
    _
  $region13: #{recommendation_forward.1} parent=0 // pred_fallthru
    _
  // Predicated region
  $region14: #{recommendation_forward.1} parent=0 // pred_check
    _
  $region15: #{recommendation_forward.1} parent=0 // pred_check_branch
    %20 = sbr.rel (0) target = $region17
  $region16: #{recommendation_forward.1} parent=0 // pred_region
    _
  $region17: #{recommendation_forward.1} parent=0 // pred_fallthru
    _
  // Predicated region
  $region18: #{recommendation_forward.1} parent=0 // pred_check
    _
  $region19: #{recommendation_forward.1} parent=0 // pred_check_branch
    %22 = sbr.rel (0) target = $region21
  $region20: #{recommendation_forward.1} parent=0 // pred_region
    _
  $region21: #{recommendation_forward.1} parent=0 // pred_fallthru
    _
  // Predicated region
  $region22: #{recommendation_forward.1} parent=0 // pred_check
    _
  $region23: #{recommendation_forward.1} parent=0 // pred_check_branch
    %24 = sbr.rel (0) target = $region25
  $region24: #{recommendation_forward.1} parent=0 // pred_region
    _
  $region25: #{recommendation_forward.1} parent=0 // pred_fallthru
    _
  // Predicated region
  $region26: #{recommendation_forward.1} parent=0 // pred_check
    _
  $region27: #{recommendation_forward.1} parent=0 // pred_check_branch
    %26 = sbr.rel (0) target = $region29
  $region28: #{recommendation_forward.1} parent=0 // pred_region
    _
  $region29: #{recommendation_forward.1} parent=0 // pred_fallthru
    _
  %v27 = vld [vmem:[%s0] sm:$0xff]
  %v28 = vld [vmem:[%s0 + $0x8] sm:$0xff]
  %v29 = vld [vmem:[%s0 + $0x10] sm:$0xff]
  %v30 = vld [vmem:[%s0 + $0x18] sm:$0xff]
  %v31 = vld [vmem:[%s0 + $0x20] sm:$0xff]
  %v32 = vld [vmem:[%s0 + $0x28] sm:$0xff]
  %v33 = vld [vmem:[%s0 + $0x30] sm:$0xff]
  %v34 = vld [vmem:[%s0 + $0x38] sm:$0xff]
  %v35 = vld [vmem:[%s0 + $0x40] sm:$0xff]
  %v36 = vld [vmem:[%s0 + $0x48] sm:$0xff]
  %v37 = vld [vmem:[%s0 + $0x50] sm:$0xff]
  %v38 = vld [vmem:[%s0 + $0x58] sm:$0xff]
  %v39 = vld [vmem:[%s0 + $0x60] sm:$0xff]
  %v40 = vld [vmem:[%s0 + $0x68] sm:$0xff]
  %v41 = vld [vmem:[%s0 + $0x70] sm:$0xff]
  %v42 = vld [vmem:[%s0 + $0x78] sm:$0xff]
  %v43 = vcvt.f32.s32.to.zero.pseudo %v27
  %v44 = vcvt.f32.s32.to.zero.pseudo %v28
  %v45 = vcvt.f32.s32.to.zero.pseudo %v29
  %v46 = vcvt.f32.s32.to.zero.pseudo %v30
  %v47 = vcvt.f32.s32.to.zero.pseudo %v31
  %v48 = vcvt.f32.s32.to.zero.pseudo %v32
  %v49 = vcvt.f32.s32.to.zero.pseudo %v33
  %v50 = vcvt.f32.s32.to.zero.pseudo %v34
  %v51 = vcvt.f32.s32.to.zero.pseudo %v35
  %v52 = vcvt.f32.s32.to.zero.pseudo %v36
  %v53 = vcvt.f32.s32.to.zero.pseudo %v37
  %v54 = vcvt.f32.s32.to.zero.pseudo %v38
  %v55 = vcvt.f32.s32.to.zero.pseudo %v39
  %v56 = vcvt.f32.s32.to.zero.pseudo %v40
  %v57 = vcvt.f32.s32.to.zero.pseudo %v41
  %v58 = vcvt.f32.s32.to.zero.pseudo %v42
  %v59 = vlaneseq
  %v60 = vand.u32 %v59, 127
  %61 = vset.pattern.permute.xlu0 0
  %62 = vperm.xlu0 %61, %v43
  %v63 = vpop.permute.xlu0 %62
  %64 = vset.pattern.permute.xlu0 0
  %65 = vperm.xlu0 %64, %v44
  %v66 = vpop.permute.xlu0 %65
  %67 = vset.pattern.permute.xlu0 0
  %68 = vperm.xlu0 %67, %v45
  %v69 = vpop.permute.xlu0 %68
  %70 = vset.pattern.permute.xlu0 0
  %71 = vperm.xlu0 %70, %v46
  %v72 = vpop.permute.xlu0 %71
  %73 = vset.pattern.permute.xlu0 0
  %74 = vperm.xlu0 %73, %v47
  %v75 = vpop.permute.xlu0 %74
  %76 = vset.pattern.permute.xlu0 0
  %77 = vperm.xlu0 %76, %v48
  %v78 = vpop.permute.xlu0 %77
  %79 = vset.pattern.permute.xlu0 0
  %80 = vperm.xlu0 %79, %v49
  %v81 = vpop.permute.xlu0 %80
  %82 = vset.pattern.permute.xlu0 0
  %83 = vperm.xlu0 %82, %v50
  %v84 = vpop.permute.xlu0 %83
  %85 = vset.pattern.permute.xlu0 0
  %86 = vperm.xlu0 %85, %v51
  %v87 = vpop.permute.xlu0 %86
  %88 = vset.pattern.permute.xlu0 0
  %89 = vperm.xlu0 %88, %v52
  %v90 = vpop.permute.xlu0 %89
  %91 = vset.pattern.permute.xlu0 0
  %92 = vperm.xlu0 %91, %v53
  %v93 = vpop.permute.xlu0 %92
  %94 = vset.pattern.permute.xlu0 0
  %95 = vperm.xlu0 %94, %v54
  %v96 = vpop.permute.xlu0 %95
  %97 = vset.pattern.permute.xlu0 0
  %98 = vperm.xlu0 %97, %v55
  %v99 = vpop.permute.xlu0 %98
  %100 = vset.pattern.permute.xlu0 0
  %101 = vperm.xlu0 %100, %v56
  %v102 = vpop.permute.xlu0 %101
  %103 = vset.pattern.permute.xlu0 0
  %104 = vperm.xlu0 %103, %v57
  %v105 = vpop.permute.xlu0 %104
  %106 = vset.pattern.permute.xlu0 0
  %107 = vperm.xlu0 %106, %v58
  %v108 = vpop.permute.xlu0 %107
  %vm109 = vcmp.eq.s32.totalorder %v60, %v63
  %vm110 = vcmp.eq.s32.totalorder %v60, %v66
  %vm111 = vcmp.eq.s32.totalorder %v60, %v69
  %vm112 = vcmp.eq.s32.totalorder %v60, %v72
  %vm113 = vcmp.eq.s32.totalorder %v60, %v75
  %vm114 = vcmp.eq.s32.totalorder %v60, %v78
  %vm115 = vcmp.eq.s32.totalorder %v60, %v81
  %vm116 = vcmp.eq.s32.totalorder %v60, %v84
  %vm117 = vcmp.eq.s32.totalorder %v60, %v87
  %vm118 = vcmp.eq.s32.totalorder %v60, %v90
  %vm119 = vcmp.eq.s32.totalorder %v60, %v93
  %vm120 = vcmp.eq.s32.totalorder %v60, %v96
  %vm121 = vcmp.eq.s32.totalorder %v60, %v99
  %vm122 = vcmp.eq.s32.totalorder %v60, %v102
  %vm123 = vcmp.eq.s32.totalorder %v60, %v105
  %vm124 = vcmp.eq.s32.totalorder %v60, %v108
  %v125 = vadd.s32 %v43, 64
  %v126 = vadd.s32 %v44, 64
  %v127 = vadd.s32 %v45, 64
  %v128 = vadd.s32 %v46, 64
  %v129 = vadd.s32 %v47, 64
  %v130 = vadd.s32 %v48, 64
  %v131 = vadd.s32 %v49, 64
  %v132 = vadd.s32 %v50, 64
  %v133 = vadd.s32 %v51, 64
  %v134 = vadd.s32 %v52, 64
  %v135 = vadd.s32 %v53, 64
  %v136 = vadd.s32 %v54, 64
  %v137 = vadd.s32 %v55, 64
  %v138 = vadd.s32 %v56, 64
  %v139 = vadd.s32 %v57, 64
  %v140 = vadd.s32 %v58, 64
  %141 = vset.pattern.permute.xlu0 1
  %142 = vperm.xlu0 %141, %v125
  %v143 = vpop.permute.xlu0 %142
  %144 = vset.pattern.permute.xlu0 1
  %145 = vperm.xlu0 %144, %v126
  %v146 = vpop.permute.xlu0 %145
  %147 = vset.pattern.permute.xlu0 1
  %148 = vperm.xlu0 %147, %v127
  %v149 = vpop.permute.xlu0 %148
  %150 = vset.pattern.permute.xlu0 1
  %151 = vperm.xlu0 %150, %v128
  %v152 = vpop.permute.xlu0 %151
  %153 = vset.pattern.permute.xlu0 1
  %154 = vperm.xlu0 %153, %v129
  %v155 = vpop.permute.xlu0 %154
  %156 = vset.pattern.permute.xlu0 1
  %157 = vperm.xlu0 %156, %v130
  %v158 = vpop.permute.xlu0 %157
  %159 = vset.pattern.permute.xlu0 1
  %160 = vperm.xlu0 %159, %v131
  %v161 = vpop.permute.xlu0 %160
  %162 = vset.pattern.permute.xlu0 1
  %163 = vperm.xlu0 %162, %v132
  %v164 = vpop.permute.xlu0 %163
  %165 = vset.pattern.permute.xlu0 1
  %166 = vperm.xlu0 %165, %v133
  %v167 = vpop.permute.xlu0 %166
  %168 = vset.pattern.permute.xlu0 1
  %169 = vperm.xlu0 %168, %v134
  %v170 = vpop.permute.xlu0 %169
  %171 = vset.pattern.permute.xlu0 1
  %172 = vperm.xlu0 %171, %v135
  %v173 = vpop.permute.xlu0 %172
  %174 = vset.pattern.permute.xlu0 1
  %175 = vperm.xlu0 %174, %v136
  %v176 = vpop.permute.xlu0 %175
  %177 = vset.pattern.permute.xlu0 1
  %178 = vperm.xlu0 %177, %v137
  %v179 = vpop.permute.xlu0 %178
  %180 = vset.pattern.permute.xlu0 1
  %181 = vperm.xlu0 %180, %v138
  %v182 = vpop.permute.xlu0 %181
  %183 = vset.pattern.permute.xlu0 1
  %184 = vperm.xlu0 %183, %v139
  %v185 = vpop.permute.xlu0 %184
  %186 = vset.pattern.permute.xlu0 1
  %187 = vperm.xlu0 %186, %v140
  %v188 = vpop.permute.xlu0 %187
  %vm189 = vcmp.eq.s32.totalorder %v60, %v143
  %vm190 = vcmp.eq.s32.totalorder %v60, %v146
  %vm191 = vcmp.eq.s32.totalorder %v60, %v149
  %vm192 = vcmp.eq.s32.totalorder %v60, %v152
  %vm193 = vcmp.eq.s32.totalorder %v60, %v155
  %vm194 = vcmp.eq.s32.totalorder %v60, %v158
  %vm195 = vcmp.eq.s32.totalorder %v60, %v161
  %vm196 = vcmp.eq.s32.totalorder %v60, %v164
  %vm197 = vcmp.eq.s32.totalorder %v60, %v167
  %vm198 = vcmp.eq.s32.totalorder %v60, %v170
  %vm199 = vcmp.eq.s32.totalorder %v60, %v173
  %vm200 = vcmp.eq.s32.totalorder %v60, %v176
  %vm201 = vcmp.eq.s32.totalorder %v60, %v179
  %vm202 = vcmp.eq.s32.totalorder %v60, %v182
  %vm203 = vcmp.eq.s32.totalorder %v60, %v185
  %vm204 = vcmp.eq.s32.totalorder %v60, %v188
  %vm205 = vmor %vm109, %vm189
  %vm206 = vmor %vm110, %vm190
  %vm207 = vmor %vm111, %vm191
  %vm208 = vmor %vm112, %vm192
  %vm209 = vmor %vm113, %vm193
  %vm210 = vmor %vm114, %vm194
  %vm211 = vmor %vm115, %vm195
  %vm212 = vmor %vm116, %vm196
  %vm213 = vmor %vm117, %vm197
  %vm214 = vmor %vm118, %vm198
  %vm215 = vmor %vm119, %vm199
  %vm216 = vmor %vm120, %vm200
  %vm217 = vmor %vm121, %vm201
  %vm218 = vmor %vm122, %vm202
  %vm219 = vmor %vm123, %vm203
  %vm220 = vmor %vm124, %vm204
  %v221 = vsel %vm205, 1, 0
  %v222 = vsel %vm206, 1, 0
  %v223 = vsel %vm207, 1, 0
  %v224 = vsel %vm208, 1, 0
  %v225 = vsel %vm209, 1, 0
  %v226 = vsel %vm210, 1, 0
  %v227 = vsel %vm211, 1, 0
  %v228 = vsel %vm212, 1, 0
  %v229 = vsel %vm213, 1, 0
  %v230 = vsel %vm214, 1, 0
  %v231 = vsel %vm215, 1, 0
  %v232 = vsel %vm216, 1, 0
  %v233 = vsel %vm217, 1, 0
  %v234 = vsel %vm218, 1, 0
  %v235 = vsel %vm219, 1, 0
  %v236 = vsel %vm220, 1, 0
  %v237 = vcvt.s32.f32 %v221
  %v238 = vcvt.s32.f32 %v222
  %v239 = vcvt.s32.f32 %v223
  %v240 = vcvt.s32.f32 %v224
  %v241 = vcvt.s32.f32 %v225
  %v242 = vcvt.s32.f32 %v226
  %v243 = vcvt.s32.f32 %v227
  %v244 = vcvt.s32.f32 %v228
  %v245 = vcvt.s32.f32 %v229
  %v246 = vcvt.s32.f32 %v230
  %v247 = vcvt.s32.f32 %v231
  %v248 = vcvt.s32.f32 %v232
  %v249 = vcvt.s32.f32 %v233
  %v250 = vcvt.s32.f32 %v234
  %v251 = vcvt.s32.f32 %v235
  %v252 = vcvt.s32.f32 %v236
  %v253 = vld [vmem:[%s1] sm:$0xff]
  %v254 = vld [vmem:[%s1 + $0x8] sm:$0xff]
  %v255 = vld [vmem:[%s1 + $0x10] sm:$0xff]
  %v256 = vld [vmem:[%s1 + $0x18] sm:$0xff]
  %v257 = vld [vmem:[%s1 + $0x20] sm:$0xff]
  %v258 = vld [vmem:[%s1 + $0x28] sm:$0xff]
  %v259 = vld [vmem:[%s1 + $0x30] sm:$0xff]
  %v260 = vld [vmem:[%s1 + $0x38] sm:$0xff]
  %v261 = vld [vmem:[%s1 + $0x40] sm:$0xff]
  %v262 = vld [vmem:[%s1 + $0x48] sm:$0xff]
  %v263 = vld [vmem:[%s1 + $0x50] sm:$0xff]
  %v264 = vld [vmem:[%s1 + $0x58] sm:$0xff]
  %v265 = vld [vmem:[%s1 + $0x60] sm:$0xff]
  %v266 = vld [vmem:[%s1 + $0x68] sm:$0xff]
  %v267 = vld [vmem:[%s1 + $0x70] sm:$0xff]
  %v268 = vld [vmem:[%s1 + $0x78] sm:$0xff]
  %v269 = vld [vmem:[%s2] sm:$0x1]
  %271 = vset.pattern.permute.xlu0 2
  %272 = vperm.xlu0 %271, %v27
  %v273 = vpop.permute.xlu0 %272
  %276 = vset.pattern.permute.xlu0 2
  %277 = vperm.xlu0 %276, %v28
  %v278 = vpop.permute.xlu0 %277
  %281 = vset.pattern.permute.xlu0 2
  %282 = vperm.xlu0 %281, %v29
  %v283 = vpop.permute.xlu0 %282
  %286 = vset.pattern.permute.xlu0 2
  %287 = vperm.xlu0 %286, %v30
  %v288 = vpop.permute.xlu0 %287
  %291 = vset.pattern.permute.xlu0 2
  %292 = vperm.xlu0 %291, %v31
  %v293 = vpop.permute.xlu0 %292
  %296 = vset.pattern.permute.xlu0 2
  %297 = vperm.xlu0 %296, %v32
  %v298 = vpop.permute.xlu0 %297
  %301 = vset.pattern.permute.xlu0 2
  %302 = vperm.xlu0 %301, %v33
  %v303 = vpop.permute.xlu0 %302
  %306 = vset.pattern.permute.xlu0 2
  %307 = vperm.xlu0 %306, %v34
  %v308 = vpop.permute.xlu0 %307
  %311 = vset.pattern.permute.xlu0 2
  %312 = vperm.xlu0 %311, %v35
  %v313 = vpop.permute.xlu0 %312
  %316 = vset.pattern.permute.xlu0 2
  %317 = vperm.xlu0 %316, %v36
  %v318 = vpop.permute.xlu0 %317
  %321 = vset.pattern.permute.xlu0 2
  %322 = vperm.xlu0 %321, %v37
  %v323 = vpop.permute.xlu0 %322
  %326 = vset.pattern.permute.xlu0 2
  %327 = vperm.xlu0 %326, %v38
  %v328 = vpop.permute.xlu0 %327
  %331 = vset.pattern.permute.xlu0 2
  %332 = vperm.xlu0 %331, %v39
  %v333 = vpop.permute.xlu0 %332
  %336 = vset.pattern.permute.xlu0 2
  %337 = vperm.xlu0 %336, %v40
  %v338 = vpop.permute.xlu0 %337
  %341 = vset.pattern.permute.xlu0 2
  %342 = vperm.xlu0 %341, %v41
  %v343 = vpop.permute.xlu0 %342
  %346 = vset.pattern.permute.xlu0 2
  %347 = vperm.xlu0 %346, %v42
  %v348 = vpop.permute.xlu0 %347
  %v351 = vperm.slane %v269, 0
  %v353 = vmul.f32 %v273, %v351
  %v354 = vmul.f32 %v278, %v351
  %v355 = vmul.f32 %v283, %v351
  %v356 = vmul.f32 %v288, %v351
  %v357 = vmul.f32 %v293, %v351
  %v358 = vmul.f32 %v298, %v351
  %v359 = vmul.f32 %v303, %v351
  %v360 = vmul.f32 %v308, %v351
  %v361 = vmul.f32 %v313, %v351
  %v362 = vmul.f32 %v318, %v351
  %v363 = vmul.f32 %v323, %v351
  %v364 = vmul.f32 %v328, %v351
  %v365 = vmul.f32 %v333, %v351
  %v366 = vmul.f32 %v338, %v351
  %v367 = vmul.f32 %v343, %v351
  %v368 = vmul.f32 %v348, %v351
  %369 = vmatpush.msra.mxu0 %v268
  %370 = vmatpush.msra.mxu0 %v267
  %371 = vmatpush.msra.mxu0 %v266
  %372 = vmatpush.msra.mxu0 %v265
  %373 = vmatpush.msra.mxu0 %v264
  %374 = vmatpush.msra.mxu0 %v263
  %375 = vmatpush.msra.mxu0 %v262
  %376 = vmatpush.msra.mxu0 %v261
  %377 = vmatpush.msra.mxu0 %v260
  %378 = vmatpush.msra.mxu0 %v259
  %379 = vmatpush.msra.mxu0 %v258
  %380 = vmatpush.msra.mxu0 %v257
  %381 = vmatpush.msra.mxu0 %v256
  %382 = vmatpush.msra.mxu0 %v255
  %383 = vmatpush.msra.mxu0 %v254
  %384 = vmatpush.msra.mxu0 %v253
  %385 = vmatmul.f32.gmra.mxu0 %v237
  %v386 = vpop.f32.mrf.mxu0
  %v387 = vadd.f32 %v353, %v386
  %388 = vmatmul.f32.gmra.mxu0 %v238
  %v389 = vpop.f32.mrf.mxu0
  %v390 = vadd.f32 %v354, %v389
  %391 = vmatmul.f32.gmra.mxu0 %v239
  %v392 = vpop.f32.mrf.mxu0
  %v393 = vadd.f32 %v355, %v392
  %394 = vmatmul.f32.gmra.mxu0 %v240
  %v395 = vpop.f32.mrf.mxu0
  %v396 = vadd.f32 %v356, %v395
  %397 = vmatmul.f32.gmra.mxu0 %v241
  %v398 = vpop.f32.mrf.mxu0
  %v399 = vadd.f32 %v357, %v398
  %400 = vmatmul.f32.gmra.mxu0 %v242
  %v401 = vpop.f32.mrf.mxu0
  %v402 = vadd.f32 %v358, %v401
  %403 = vmatmul.f32.gmra.mxu0 %v243
  %v404 = vpop.f32.mrf.mxu0
  %v405 = vadd.f32 %v359, %v404
  %406 = vmatmul.f32.gmra.mxu0 %v244
  %v407 = vpop.f32.mrf.mxu0
  %v408 = vadd.f32 %v360, %v407
  %409 = vmatmul.f32.gmra.mxu0 %v245
  %v410 = vpop.f32.mrf.mxu0
  %v411 = vadd.f32 %v361, %v410
  %412 = vmatmul.f32.gmra.mxu0 %v246
  %v413 = vpop.f32.mrf.mxu0
  %v414 = vadd.f32 %v362, %v413
  %415 = vmatmul.f32.gmra.mxu0 %v247
  %v416 = vpop.f32.mrf.mxu0
  %v417 = vadd.f32 %v363, %v416
  %418 = vmatmul.f32.gmra.mxu0 %v248
  %v419 = vpop.f32.mrf.mxu0
  %v420 = vadd.f32 %v364, %v419
  %421 = vmatmul.f32.gmra.mxu0 %v249
  %v422 = vpop.f32.mrf.mxu0
  %v423 = vadd.f32 %v365, %v422
  %424 = vmatmul.f32.gmra.mxu0 %v250
  %v425 = vpop.f32.mrf.mxu0
  %v426 = vadd.f32 %v366, %v425
  %427 = vmatmul.f32.gmra.mxu0 %v251
  %v428 = vpop.f32.mrf.mxu0
  %v429 = vadd.f32 %v367, %v428
  %430 = vmatmul.f32.gmra.mxu0 %v252
  %v431 = vpop.f32.mrf.mxu0
  %v432 = vadd.f32 %v368, %v431
  %433 = vdwg.mxu0
  %v434 = vld [vmem:[%s3] sm:$0x1]
  %435 = vset.pattern.permute.xlu0 3
  %436 = vperm.xlu0 %435, %v27
  %v437 = vpop.permute.xlu0 %436
  %439 = vset.pattern.permute.xlu0 3
  %440 = vperm.xlu0 %439, %v28
  %v441 = vpop.permute.xlu0 %440
  %443 = vset.pattern.permute.xlu0 3
  %444 = vperm.xlu0 %443, %v29
  %v445 = vpop.permute.xlu0 %444
  %447 = vset.pattern.permute.xlu0 3
  %448 = vperm.xlu0 %447, %v30
  %v449 = vpop.permute.xlu0 %448
  %451 = vset.pattern.permute.xlu0 3
  %452 = vperm.xlu0 %451, %v31
  %v453 = vpop.permute.xlu0 %452
  %455 = vset.pattern.permute.xlu0 3
  %456 = vperm.xlu0 %455, %v32
  %v457 = vpop.permute.xlu0 %456
  %459 = vset.pattern.permute.xlu0 3
  %460 = vperm.xlu0 %459, %v33
  %v461 = vpop.permute.xlu0 %460
  %463 = vset.pattern.permute.xlu0 3
  %464 = vperm.xlu0 %463, %v34
  %v465 = vpop.permute.xlu0 %464
  %467 = vset.pattern.permute.xlu0 3
  %468 = vperm.xlu0 %467, %v35
  %v469 = vpop.permute.xlu0 %468
  %471 = vset.pattern.permute.xlu0 3
  %472 = vperm.xlu0 %471, %v36
  %v473 = vpop.permute.xlu0 %472
  %475 = vset.pattern.permute.xlu0 3
  %476 = vperm.xlu0 %475, %v37
  %v477 = vpop.permute.xlu0 %476
  %479 = vset.pattern.permute.xlu0 3
  %480 = vperm.xlu0 %479, %v38
  %v481 = vpop.permute.xlu0 %480
  %483 = vset.pattern.permute.xlu0 3
  %484 = vperm.xlu0 %483, %v39
  %v485 = vpop.permute.xlu0 %484
  %487 = vset.pattern.permute.xlu0 3
  %488 = vperm.xlu0 %487, %v40
  %v489 = vpop.permute.xlu0 %488
  %491 = vset.pattern.permute.xlu0 3
  %492 = vperm.xlu0 %491, %v41
  %v493 = vpop.permute.xlu0 %492
  %495 = vset.pattern.permute.xlu0 3
  %496 = vperm.xlu0 %495, %v42
  %v497 = vpop.permute.xlu0 %496
  %v500 = vperm.slane %v434, 0
  %v502 = vmul.f32 %v437, %v500
  %v503 = vmul.f32 %v441, %v500
  %v504 = vmul.f32 %v445, %v500
  %v505 = vmul.f32 %v449, %v500
  %v506 = vmul.f32 %v453, %v500
  %v507 = vmul.f32 %v457, %v500
  %v508 = vmul.f32 %v461, %v500
  %v509 = vmul.f32 %v465, %v500
  %v510 = vmul.f32 %v469, %v500
  %v511 = vmul.f32 %v473, %v500
  %v512 = vmul.f32 %v477, %v500
  %v513 = vmul.f32 %v481, %v500
  %v514 = vmul.f32 %v485, %v500
  %v515 = vmul.f32 %v489, %v500
  %v516 = vmul.f32 %v493, %v500
  %v517 = vmul.f32 %v497, %v500
  %v518 = vadd.f32 %v387, %v502
  %v519 = vadd.f32 %v390, %v503
  %v520 = vadd.f32 %v393, %v504
  %v521 = vadd.f32 %v396, %v505
  %v522 = vadd.f32 %v399, %v506
  %v523 = vadd.f32 %v402, %v507
  %v524 = vadd.f32 %v405, %v508
  %v525 = vadd.f32 %v408, %v509
  %v526 = vadd.f32 %v411, %v510
  %v527 = vadd.f32 %v414, %v511
  %v528 = vadd.f32 %v417, %v512
  %v529 = vadd.f32 %v420, %v513
  %v530 = vadd.f32 %v423, %v514
  %v531 = vadd.f32 %v426, %v515
  %v532 = vadd.f32 %v429, %v516
  %v533 = vadd.f32 %v432, %v517
  %v534 = vld [vmem:[%s4] sm:$0x1]
  %v536 = vperm.slane %v534, 0
  %v538 = vadd.f32 %v518, %v536
  %v539 = vadd.f32 %v519, %v536
  %v540 = vadd.f32 %v520, %v536
  %v541 = vadd.f32 %v521, %v536
  %v542 = vadd.f32 %v522, %v536
  %v543 = vadd.f32 %v523, %v536
  %v544 = vadd.f32 %v524, %v536
  %v545 = vadd.f32 %v525, %v536
  %v546 = vadd.f32 %v526, %v536
  %v547 = vadd.f32 %v527, %v536
  %v548 = vadd.f32 %v528, %v536
  %v549 = vadd.f32 %v529, %v536
  %v550 = vadd.f32 %v530, %v536
  %v551 = vadd.f32 %v531, %v536
  %v552 = vadd.f32 %v532, %v536
  %v553 = vadd.f32 %v533, %v536
  %v554 = vmax.f32 %v538, 0.0
  %v555 = vmax.f32 %v539, 0.0
  %v556 = vmax.f32 %v540, 0.0
  %v557 = vmax.f32 %v541, 0.0
  %v558 = vmax.f32 %v542, 0.0
  %v559 = vmax.f32 %v543, 0.0
  %v560 = vmax.f32 %v544, 0.0
  %v561 = vmax.f32 %v545, 0.0
  %v562 = vmax.f32 %v546, 0.0
  %v563 = vmax.f32 %v547, 0.0
  %v564 = vmax.f32 %v548, 0.0
  %v565 = vmax.f32 %v549, 0.0
  %v566 = vmax.f32 %v550, 0.0
  %v567 = vmax.f32 %v551, 0.0
  %v568 = vmax.f32 %v552, 0.0
  %v569 = vmax.f32 %v553, 0.0
  %v570 = vld [vmem:[%s5] sm:$0x1]
  %s571 = sld [smem:[#allocation2]]
  %v572 = vstv %s571
  %573 = vmatpush.xpose.msra.mxu0 %v569
  %574 = vmatpush.xpose.msra.mxu0 %v568
  %575 = vmatpush.xpose.msra.mxu0 %v567
  %576 = vmatpush.xpose.msra.mxu0 %v566
  %577 = vmatpush.xpose.msra.mxu0 %v565
  %578 = vmatpush.xpose.msra.mxu0 %v564
  %579 = vmatpush.xpose.msra.mxu0 %v563
  %580 = vmatpush.xpose.msra.mxu0 %v562
  %581 = vmatpush.xpose.msra.mxu0 %v561
  %582 = vmatpush.xpose.msra.mxu0 %v560
  %583 = vmatpush.xpose.msra.mxu0 %v559
  %584 = vmatpush.xpose.msra.mxu0 %v558
  %585 = vmatpush.xpose.msra.mxu0 %v557
  %586 = vmatpush.xpose.msra.mxu0 %v556
  %587 = vmatpush.xpose.msra.mxu0 %v555
  %588 = vmatpush.xpose.msra.mxu0 %v554
  %589 = vmatmul.f32.gmra.mxu0 %v570
  %v590 = vpop.f32.mrf.mxu0
  %v591 = vadd.f32 %v572, %v590
  %592 = vdwg.mxu0
  %v593 = vxor.u32 %v591, 2147483648
  %v594 = vmul.f32 %v593, 1.442695
  %v595 = vpow.pop %v594
  %v596 = vadd.f32 %v595, 1.0
  %v597 = vrcp.pop %v596
  %v598 = vmul.f32 %v596, %v597
  %v599 = vsub.f32 1.0, %v598
  %v600 = vmul.f32 %v597, %v599
  %v601 = vadd.f32 %v597, %v600
  %vm602 = vweird.f32 %v596
  %vm603 = vweird.f32 %v597
  %vm604 = vmor %vm602, %vm603
  %v605 = vsel %vm604, %v597, %v601
  %v606 = vand.u32 2147483647, %v596
  %vm607 = vcmp.eq.f32.partialorder %v606, 8.507059e+37
  %v608 = vand.u32 %v596, 2147483648
  %v609 = vor.u32 1.1754944e-38, %v608
  %v610 = vsel %vm607, %v609, %v605
  %v611 = vmul.f32 1.0, %v610
  %612 = vst [vmem:[%s7] sm:$0x1] %v611
  // Predicated region
  $region30: #{recommendation_forward.1} parent=0 // pred_check
    _
  $region31: #{recommendation_forward.1} parent=0 // pred_check_branch
    %614 = sbr.rel (0) target = $region33
  $region32: #{recommendation_forward.1} parent=0 // pred_region
    _
  $region33: #{recommendation_forward.1} parent=0 // pred_fallthru
    _
  // Predicated region
  $region34: #{recommendation_forward.1} parent=0 // pred_check
    _
  $region35: #{recommendation_forward.1} parent=0 // pred_check_branch
    %616 = sbr.rel (0) target = $region37
  $region36: #{recommendation_forward.1} parent=0 // pred_region
    _
  $region37: #{recommendation_forward.1} parent=0 // pred_fallthru
    _

</llo_original>
